<compile_context>
chip_gen: v7x
topology: tpu7x:2x2x1
jax: 0.10.0
libtpu: 0.0.40
codegen_flags: <defaults>
</compile_context>

<pallas_src>
import functools

import jax
import jax.numpy as jnp
from jax import lax
from jax.experimental import pallas as pl
from jax.experimental.pallas import tpu as pltpu
import numpy as np


def _round_up(x, m):
    return ((x + m - 1) // m) * m


def _mixmatch_loss_kernel(xout_ref, xtgt_ref, uout_ref, utgt_ref, out_ref,
                          acc_ref, *, tb, bx, bu, cu):
    i = pl.program_id(0)
    n = pl.num_programs(0)

    @pl.when(i == 0)
    def _init():
        acc_ref[0] = 0.0
        acc_ref[1] = 0.0

    # Row ids of this batch tile (2-D iota for TPU) -> mask padded rows.
    row_ids = i * tb + lax.broadcasted_iota(jnp.int32, (tb, 1), 0)   # (TB, 1)

    # ---- Lx partial: sum_b sum_c log_softmax(x) * xtarget over valid rows ----
    x = xout_ref[...].astype(jnp.float32)
    xt = xtgt_ref[...].astype(jnp.float32)
    x_max = jnp.max(x, axis=1, keepdims=True)
    x_shift = x - x_max
    lse = jnp.log(jnp.sum(jnp.exp(x_shift), axis=1, keepdims=True))
    log_probs = x_shift - lse                                         # (TB, C)
    per_sample = jnp.sum(log_probs * xt, axis=1, keepdims=True)       # (TB, 1)
    x_mask = (row_ids < bx).astype(jnp.float32)
    acc_ref[0] += jnp.sum(per_sample * x_mask)

    # ---- Lu partial: sum_b sum_c (softmax(u) - utarget)^2 over valid rows ----
    u = uout_ref[...].astype(jnp.float32)
    ut = utgt_ref[...].astype(jnp.float32)
    u_max = jnp.max(u, axis=1, keepdims=True)
    u_exp = jnp.exp(u - u_max)
    denom = jnp.sum(u_exp, axis=1, keepdims=True)
    u_prob = u_exp * pl.reciprocal(denom, approx=True)                # EUP vrcp
    diff = u_prob - ut
    per_row = jnp.sum(diff * diff, axis=1, keepdims=True)             # (TB, 1)
    u_mask = (row_ids < bu).astype(jnp.float32)
    acc_ref[1] += jnp.sum(per_row * u_mask)

    # ---- Finalize: turn accumulated sums into the two mean-based losses ----
    @pl.when(i == n - 1)
    def _final():
        out_ref[0] = -acc_ref[0] * (1.0 / bx)
        out_ref[1] = acc_ref[1] * (1.0 / (bu * cu))


# 4 input streams x 2 pipeline buffers x TB x C x 4 B must stay well under the
# v7x 32 MiB scoped-VMEM default (64 MiB physical); 16 MiB leaves headroom.
_VMEM_BUDGET_BYTES = 16 * 1024 * 1024
_MAX_TB = 512


def _choose_tb(b_max, c_max):
    tb = min(_MAX_TB, _round_up(b_max, 8))
    tb_budget = _VMEM_BUDGET_BYTES // (4 * 2 * 4 * max(c_max, 1))
    tb_budget = max(8, (tb_budget // 8) * 8)
    return max(8, min(tb, tb_budget))


@jax.jit
def mixmatch_loss_pallas(xoutput, xtarget, uoutput, utarget):
    """Returns (Lx, Lu) as float32 scalars computed in a tiled Pallas TPU kernel."""
    bx, cx = xoutput.shape
    bu, cu = uoutput.shape

    tb = _choose_tb(max(bx, bu), max(cx, cu))
    num_tiles = (max(bx, bu) + tb - 1) // tb
    padded_b = num_tiles * tb

    def pad_rows(a):
        return jnp.pad(a, ((0, padded_b - a.shape[0]), (0, 0)))

    xo, xt = pad_rows(xoutput), pad_rows(xtarget)
    uo, ut = pad_rows(uoutput), pad_rows(utarget)

    kernel = functools.partial(_mixmatch_loss_kernel, tb=tb, bx=bx, bu=bu, cu=cu)

    itemsize = jnp.dtype(xoutput.dtype).itemsize
    cost = pl.CostEstimate(
        flops=int(10 * (bx * cx + bu * cu)),
        transcendentals=int(2 * (bx * cx + bu * cu)),
        bytes_accessed=int(2 * (bx * cx + bu * cu) * itemsize + 8),
    )

    out = pl.pallas_call(
        kernel,
        grid=(num_tiles,),
        in_specs=[
            pl.BlockSpec((tb, cx), lambda i: (i, 0)),   # xoutput
            pl.BlockSpec((tb, cx), lambda i: (i, 0)),   # xtarget
            pl.BlockSpec((tb, cu), lambda i: (i, 0)),   # uoutput
            pl.BlockSpec((tb, cu), lambda i: (i, 0)),   # utarget
        ],
        out_specs=pl.BlockSpec(memory_space=pltpu.MemorySpace.SMEM),
        out_shape=jax.ShapeDtypeStruct((2,), jnp.float32),
        scratch_shapes=[pltpu.SMEM((2,), jnp.float32)],
        compiler_params=pltpu.CompilerParams(
            dimension_semantics=("arbitrary",)),  # batch axis carries the accumulator
        cost_estimate=cost,
    )(xo, xt, uo, ut)
    # TODO(synk): on v7x (2 TCs) add a leading "parallel" grid axis splitting the
    #             batch across cores with per-core accumulators combined here.
    # TODO(synk): for C << 128, fold multiple rows per lane-row (lane-dense layout)
    #             to recover the 128/C vreg/VMEM utilization loss.
    return out[0], out[1]


class MixMatchLossPallas:
    """JAX/Pallas port of MixMatchLoss (stateful current_lambda_u like the nn.Module)."""

    def __init__(self, rampup_length, lambda_u=75):
        self.rampup_length = rampup_length
        self.lambda_u = lambda_u
        self.current_lambda_u = lambda_u

    def linear_rampup(self, epoch):
        # Pure scalar bookkeeping; stays on the host (no Pallas equivalent needed).
        if self.rampup_length == 0:
            return 1.0
        current = np.clip(epoch / self.rampup_length, 0.0, 1.0)
        self.current_lambda_u = float(current) * self.lambda_u

    def __call__(self, xoutput, xtarget, uoutput, utarget, epoch):
        self.linear_rampup(epoch)
        Lx, Lu = mixmatch_loss_pallas(xoutput, xtarget, uoutput, utarget)
        return Lx, Lu, self.current_lambda_u


def _reference(xoutput, xtarget, uoutput, utarget):
    log_probs = jax.nn.log_softmax(xoutput, axis=1)
    Lx = -jnp.mean(jnp.sum(log_probs * xtarget, axis=1))
    uprob = jax.nn.softmax(uoutput, axis=1)
    Lu = jnp.mean((uprob - utarget) ** 2)
    return Lx, Lu


if __name__ == "__main__":
    key = jax.random.PRNGKey(0)
    k1, k2, k3, k4 = jax.random.split(key, 4)

    B, C = 8, 32  # small (batch, num_classes)
    xoutput = jax.random.normal(k1, (B, C), dtype=jnp.float32)
    uoutput = jax.random.normal(k2, (B, C), dtype=jnp.float32)
    # Soft targets: valid probability distributions over classes.
    xtarget = jax.nn.softmax(jax.random.normal(k3, (B, C), dtype=jnp.float32), axis=1)
    utarget = jax.nn.softmax(jax.random.normal(k4, (B, C), dtype=jnp.float32), axis=1)

    loss_mod = MixMatchLossPallas(rampup_length=10, lambda_u=75)
    Lx, Lu, lam = loss_mod(xoutput, xtarget, uoutput, utarget, epoch=3)
    Lx, Lu = jax.block_until_ready(Lx), jax.block_until_ready(Lu)

    # Sanity check against pure-JAX reference.
    Lx_ref, Lu_ref = _reference(xoutput, xtarget, uoutput, utarget)
    np.testing.assert_allclose(np.asarray(Lx), np.asarray(Lx_ref), rtol=1e-5, atol=1e-5)
    # Lu tolerance relaxed slightly for pl.reciprocal(approx=True).
    np.testing.assert_allclose(np.asarray(Lu), np.asarray(Lu_ref), rtol=2e-3, atol=2e-5)
    assert abs(lam - 0.3 * 75) < 1e-9

    print("KERNEL_OK")
</pallas_src>

<mosaic_0001>
module attributes {stable_mosaic.version = 11 : i64} {
  func.func @_mixmatch_loss_kernel(%arg0: i32, %arg1: memref<8x32xf32, #tpu.memory_space<vmem>>, %arg2: memref<8x32xf32, #tpu.memory_space<vmem>>, %arg3: memref<8x32xf32, #tpu.memory_space<vmem>>, %arg4: memref<8x32xf32, #tpu.memory_space<vmem>>, %arg5: memref<2xf32, #tpu.memory_space<smem>>, %arg6: memref<2xf32, #tpu.memory_space<smem>>) attributes {dimension_semantics = [#tpu.dimension_semantics<arbitrary>], iteration_bounds = array<i64: 1>, scalar_prefetch = 0 : i64, scratch_operands = 1 : i64, tpu.core_type = #tpu.core_type<tc>, window_params = [{transform_indices = @transform_0, window_bounds = array<i64: 8, 32>}, {transform_indices = @transform_1, window_bounds = array<i64: 8, 32>}, {transform_indices = @transform_2, window_bounds = array<i64: 8, 32>}, {transform_indices = @transform_3, window_bounds = array<i64: 8, 32>}, {transform_indices = @transform_4, window_bounds = array<i64: 2>}]} {
    %c0_i32 = arith.constant 0 : i32
    %0 = arith.cmpi eq, %arg0, %c0_i32 : i32
    %1 = arith.extui %0 : i1 to i32
    %c0_i32_0 = arith.constant 0 : i32
    %2 = arith.cmpi ne, %1, %c0_i32_0 : i32
    scf.if %2 {
      %cst_22 = arith.constant 0.000000e+00 : f32
      %c0_23 = arith.constant 0 : index
      %65 = memref.load %arg6[%c0_23] : memref<2xf32, #tpu.memory_space<smem>>
      memref.store %cst_22, %arg6[%c0_23] : memref<2xf32, #tpu.memory_space<smem>>
      %cst_24 = arith.constant 0.000000e+00 : f32
      %c1_25 = arith.constant 1 : index
      %66 = memref.load %arg6[%c1_25] : memref<2xf32, #tpu.memory_space<smem>>
      memref.store %cst_24, %arg6[%c1_25] : memref<2xf32, #tpu.memory_space<smem>>
    } else {
    }
    %c8_i32 = arith.constant 8 : i32
    %3 = arith.muli %arg0, %c8_i32 : i32
    %4 = tpu.iota {dimensions = array<i32: 0>} : vector<8x1xi32>
    %5 = vector.broadcast %3 : i32 to vector<8x1xi32>
    %6 = arith.addi %5, %4 : vector<8x1xi32>
    %c0 = arith.constant 0 : index
    %c0_1 = arith.constant 0 : index
    %7 = vector.load %arg1[%c0, %c0_1] : memref<8x32xf32, #tpu.memory_space<vmem>>, vector<8x32xf32>
    %c0_2 = arith.constant 0 : index
    %c0_3 = arith.constant 0 : index
    %8 = vector.load %arg2[%c0_2, %c0_3] : memref<8x32xf32, #tpu.memory_space<vmem>>, vector<8x32xf32>
    %cst = arith.constant dense<0xFF800000> : vector<8xf32>
    %9 = vector.multi_reduction <maximumf>, %7, %cst [1] : vector<8x32xf32> to vector<8xf32>
    %10 = vector.shape_cast %9 : vector<8xf32> to vector<8x1xf32>
    %11 = vector.broadcast %10 : vector<8x1xf32> to vector<8x32xf32>
    %12 = arith.subf %7, %11 : vector<8x32xf32>
    %13 = math.exp %12 : vector<8x32xf32>
    %cst_4 = arith.constant dense<0.000000e+00> : vector<8xf32>
    %14 = vector.multi_reduction <add>, %13, %cst_4 [1] : vector<8x32xf32> to vector<8xf32>
    %15 = vector.shape_cast %14 : vector<8xf32> to vector<8x1xf32>
    %16 = math.log %15 : vector<8x1xf32>
    %17 = vector.broadcast %16 : vector<8x1xf32> to vector<8x32xf32>
    %18 = arith.subf %12, %17 : vector<8x32xf32>
    %19 = arith.mulf %18, %8 : vector<8x32xf32>
    %cst_5 = arith.constant dense<0.000000e+00> : vector<8xf32>
    %20 = vector.multi_reduction <add>, %19, %cst_5 [1] : vector<8x32xf32> to vector<8xf32>
    %21 = vector.shape_cast %20 : vector<8xf32> to vector<8x1xf32>
    %c8_i32_6 = arith.constant 8 : i32
    %22 = vector.broadcast %c8_i32_6 : i32 to vector<8x1xi32>
    %23 = arith.cmpi slt, %6, %22 : vector<8x1xi32>
    %24 = arith.extui %23 : vector<8x1xi1> to vector<8x1xi32>
    %25 = arith.sitofp %24 : vector<8x1xi32> to vector<8x1xf32>
    %c0_7 = arith.constant 0 : index
    %26 = memref.load %arg6[%c0_7] : memref<2xf32, #tpu.memory_space<smem>>
    %27 = arith.mulf %21, %25 : vector<8x1xf32>
    %28 = vector.shape_cast %27 : vector<8x1xf32> to vector<1x8x1xf32>
    %cst_8 = arith.constant dense<0.000000e+00> : vector<1xf32>
    %29 = vector.multi_reduction <add>, %28, %cst_8 [1, 2] : vector<1x8x1xf32> to vector<1xf32>
    %30 = vector.shape_cast %29 : vector<1xf32> to vector<1x1x1xf32>
    %31 = vector.extract %30[0, 0, 0] : f32 from vector<1x1x1xf32>
    %32 = arith.addf %26, %31 : f32
    %c0_9 = arith.constant 0 : index
    %33 = memref.load %arg6[%c0_9] : memref<2xf32, #tpu.memory_space<smem>>
    memref.store %32, %arg6[%c0_9] : memref<2xf32, #tpu.memory_space<smem>>
    %c0_10 = arith.constant 0 : index
    %c0_11 = arith.constant 0 : index
    %34 = vector.load %arg3[%c0_10, %c0_11] : memref<8x32xf32, #tpu.memory_space<vmem>>, vector<8x32xf32>
    %c0_12 = arith.constant 0 : index
    %c0_13 = arith.constant 0 : index
    %35 = vector.load %arg4[%c0_12, %c0_13] : memref<8x32xf32, #tpu.memory_space<vmem>>, vector<8x32xf32>
    %cst_14 = arith.constant dense<0xFF800000> : vector<8xf32>
    %36 = vector.multi_reduction <maximumf>, %34, %cst_14 [1] : vector<8x32xf32> to vector<8xf32>
    %37 = vector.shape_cast %36 : vector<8xf32> to vector<8x1xf32>
    %38 = vector.broadcast %37 : vector<8x1xf32> to vector<8x32xf32>
    %39 = arith.subf %34, %38 : vector<8x32xf32>
    %40 = math.exp %39 : vector<8x32xf32>
    %cst_15 = arith.constant dense<0.000000e+00> : vector<8xf32>
    %41 = vector.multi_reduction <add>, %40, %cst_15 [1] : vector<8x32xf32> to vector<8xf32>
    %42 = vector.shape_cast %41 : vector<8xf32> to vector<8x1xf32>
    %43 = tpu.reciprocal %42 {approx = true} : vector<8x1xf32> -> vector<8x1xf32>
    %44 = vector.broadcast %43 : vector<8x1xf32> to vector<8x32xf32>
    %45 = arith.mulf %40, %44 : vector<8x32xf32>
    %46 = arith.subf %45, %35 : vector<8x32xf32>
    %47 = arith.mulf %46, %46 : vector<8x32xf32>
    %cst_16 = arith.constant dense<0.000000e+00> : vector<8xf32>
    %48 = vector.multi_reduction <add>, %47, %cst_16 [1] : vector<8x32xf32> to vector<8xf32>
    %49 = vector.shape_cast %48 : vector<8xf32> to vector<8x1xf32>
    %c8_i32_17 = arith.constant 8 : i32
    %50 = vector.broadcast %c8_i32_17 : i32 to vector<8x1xi32>
    %51 = arith.cmpi slt, %6, %50 : vector<8x1xi32>
    %52 = arith.extui %51 : vector<8x1xi1> to vector<8x1xi32>
    %53 = arith.sitofp %52 : vector<8x1xi32> to vector<8x1xf32>
    %c1 = arith.constant 1 : index
    %54 = memref.load %arg6[%c1] : memref<2xf32, #tpu.memory_space<smem>>
    %55 = arith.mulf %49, %53 : vector<8x1xf32>
    %56 = vector.shape_cast %55 : vector<8x1xf32> to vector<1x8x1xf32>
    %cst_18 = arith.constant dense<0.000000e+00> : vector<1xf32>
    %57 = vector.multi_reduction <add>, %56, %cst_18 [1, 2] : vector<1x8x1xf32> to vector<1xf32>
    %58 = vector.shape_cast %57 : vector<1xf32> to vector<1x1x1xf32>
    %59 = vector.extract %58[0, 0, 0] : f32 from vector<1x1x1xf32>
    %60 = arith.addf %54, %59 : f32
    %c1_19 = arith.constant 1 : index
    %61 = memref.load %arg6[%c1_19] : memref<2xf32, #tpu.memory_space<smem>>
    memref.store %60, %arg6[%c1_19] : memref<2xf32, #tpu.memory_space<smem>>
    %c0_i32_20 = arith.constant 0 : i32
    %62 = arith.cmpi eq, %arg0, %c0_i32_20 : i32
    %63 = arith.extui %62 : i1 to i32
    %c0_i32_21 = arith.constant 0 : i32
    %64 = arith.cmpi ne, %63, %c0_i32_21 : i32
    scf.if %64 {
      %c0_22 = arith.constant 0 : index
      %65 = memref.load %arg6[%c0_22] : memref<2xf32, #tpu.memory_space<smem>>
      %cst_23 = arith.constant 0.000000e+00 : f32
      %66 = arith.subf %cst_23, %65 : f32
      %cst_24 = arith.constant 1.250000e-01 : f32
      %67 = arith.mulf %66, %cst_24 : f32
      %c0_25 = arith.constant 0 : index
      %68 = memref.load %arg5[%c0_25] : memref<2xf32, #tpu.memory_space<smem>>
      memref.store %67, %arg5[%c0_25] : memref<2xf32, #tpu.memory_space<smem>>
      %c1_26 = arith.constant 1 : index
      %69 = memref.load %arg6[%c1_26] : memref<2xf32, #tpu.memory_space<smem>>
      %cst_27 = arith.constant 3.906250e-03 : f32
      %70 = arith.mulf %69, %cst_27 : f32
      %c1_28 = arith.constant 1 : index
      %71 = memref.load %arg5[%c1_28] : memref<2xf32, #tpu.memory_space<smem>>
      memref.store %70, %arg5[%c1_28] : memref<2xf32, #tpu.memory_space<smem>>
    } else {
    }
    return
  }
  func.func @transform_0(%arg0: i32) -> (i32, i32) {
    %c0_i32 = arith.constant 0 : i32
    %c0_i32_0 = arith.constant 0 : i32
    return %arg0, %c0_i32 : i32, i32
  }
  func.func @transform_1(%arg0: i32) -> (i32, i32) {
    %c0_i32 = arith.constant 0 : i32
    %c0_i32_0 = arith.constant 0 : i32
    return %arg0, %c0_i32 : i32, i32
  }
  func.func @transform_2(%arg0: i32) -> (i32, i32) {
    %c0_i32 = arith.constant 0 : i32
    %c0_i32_0 = arith.constant 0 : i32
    return %arg0, %c0_i32 : i32, i32
  }
  func.func @transform_3(%arg0: i32) -> (i32, i32) {
    %c0_i32 = arith.constant 0 : i32
    %c0_i32_0 = arith.constant 0 : i32
    return %arg0, %c0_i32 : i32, i32
  }
  func.func @transform_4(%arg0: i32) -> i32 {
    %c0_i32 = arith.constant 0 : i32
    %c0_i32_0 = arith.constant 0 : i32
    return %c0_i32 : i32
  }
}

</mosaic_0001>

<llo_original>
// kernel: mixmatch_loss_pallas.1
$region0: #{mixmatch_loss_pallas.1}
  #allocation0 [shape = 'u32[]', space=smem, size = 0x4, offset = 0x4, fixed_abs, tag = 'smem constant byte address 0x4 - core index']
  #allocation1 [shape = 'u32[144,128]{1,0:T(1,128)}', space=vmem, size = 0x12000, scoped, tag = 'internal scratch']
  #allocation2 [shape = 'f32[2]{0:T(128)}', space=smem, size = 0x200, scoped, tag = 'scratch operand']
  %s0 = inlined_call_operand.hbm [shape: f32[8,32], index: 0, kind: input, shape index: {}]
  %s1 = inlined_call_operand.hbm [shape: f32[8,32], index: 1, kind: input, shape index: {}]
  %s2 = inlined_call_operand.hbm [shape: f32[8,32], index: 2, kind: input, shape index: {}]
  %s3 = inlined_call_operand.vmem [shape: f32[8,32], index: 3, kind: input, shape index: {}]
  %s4 = inlined_call_operand.vmem [shape: f32[2], index: 4, kind: output, shape index: {}]
  %s5 = sld [smem:[#allocation0]]
  $region46: #{mixmatch_loss_pallas.1} parent=0
    _
  %s7 = ssub.s32 1, %s5
  %s8 = scalar_select 0, %s7, %s5
  $region1: #{mixmatch_loss_pallas.1} parent=0
    #allocation3 [shape = 'u8[4096]{0}', space=vmem, size = 0x1000, scoped, tag = 'input window, operand 0, single buffered']
    #allocation4 [shape = 's32[1]{0}', space=sflag, size = 0x4, scoped, tag = 'scoped memory for mixmatch_loss_pallas.1']
    #allocation5 [shape = 's32[1]{0}', space=sflag, size = 0x4, scoped, tag = 'scoped memory for mixmatch_loss_pallas.1']
    #allocation6 [shape = 'u8[4096]{0}', space=vmem, size = 0x1000, scoped, tag = 'input window, operand 1, single buffered']
    #allocation7 [shape = 's32[1]{0}', space=sflag, size = 0x4, scoped, tag = 'scoped memory for mixmatch_loss_pallas.1']
    #allocation8 [shape = 'u8[4096]{0}', space=vmem, size = 0x1000, scoped, tag = 'input window, operand 2, single buffered']
    #allocation9 [shape = 'u8[512]{0}', space=smem, size = 0x200, scoped, tag = 'output window, operand 0, single buffered']
    %9 = vsyncpa [#allocation4], 0
    %10 = vsyncpa [#allocation7], 0
    %11 = vsyncpa [#allocation5], 0
    // Predicated region
    $region2: #{mixmatch_loss_pallas.1} parent=1 // pred_check
      _
    $region3: #{mixmatch_loss_pallas.1} parent=1 // pred_check_branch
      %13 = sbr.rel (0) target = $region5
    $region4: #{mixmatch_loss_pallas.1} parent=1 // pred_region
      %s15 = ssub.s32 128, 128
      %16 = vsyncadd [#allocation4], %s15
      %s18 = sshll.u32 [#allocation3], 4
      %s19 = int_to_ptr.vmem [resolvable:$true] %s18
      %21 = dma.hbm_to_vmem [thread:$0]  %s0, 128, %s19, [#allocation4]
    $region5: #{mixmatch_loss_pallas.1} parent=1 // pred_fallthru
      _
    // Predicated region
    $region6: #{mixmatch_loss_pallas.1} parent=1 // pred_check
      _
    $region7: #{mixmatch_loss_pallas.1} parent=1 // pred_check_branch
      %23 = sbr.rel (0) target = $region9
    $region8: #{mixmatch_loss_pallas.1} parent=1 // pred_region
      %s25 = ssub.s32 128, 128
      %26 = vsyncadd [#allocation7], %s25
      %s28 = sshll.u32 [#allocation6], 4
      %s29 = int_to_ptr.vmem [resolvable:$true] %s28
      %31 = dma.hbm_to_vmem [thread:$0]  %s1, 128, %s29, [#allocation7]
    $region9: #{mixmatch_loss_pallas.1} parent=1 // pred_fallthru
      _
    // Predicated region
    $region10: #{mixmatch_loss_pallas.1} parent=1 // pred_check
      _
    $region11: #{mixmatch_loss_pallas.1} parent=1 // pred_check_branch
      %33 = sbr.rel (0) target = $region13
    $region12: #{mixmatch_loss_pallas.1} parent=1 // pred_region
      %s35 = ssub.s32 128, 128
      %36 = vsyncadd [#allocation7], %s35
      %s38 = sshll.u32 [#allocation8], 4
      %s39 = int_to_ptr.vmem [resolvable:$true] %s38
      %41 = dma.hbm_to_vmem [thread:$0]  %s2, 128, %s39, [#allocation7]
    $region13: #{mixmatch_loss_pallas.1} parent=1 // pred_fallthru
      _
    // Predicated region
    $region14: #{mixmatch_loss_pallas.1} parent=1 // pred_check
      _
    $region15: #{mixmatch_loss_pallas.1} parent=1 // pred_check_branch
      %43 = sbr.rel (0) target = $region17
    $region16: #{mixmatch_loss_pallas.1} parent=1 // pred_region
      _
    $region17: #{mixmatch_loss_pallas.1} parent=1 // pred_fallthru
      _
    // Predicated region
    $region18: #{mixmatch_loss_pallas.1} parent=1 // pred_check
      _
    $region19: #{mixmatch_loss_pallas.1} parent=1 // pred_check_branch
      %45 = sbr.rel (0) target = $region21
    $region20: #{mixmatch_loss_pallas.1} parent=1 // pred_region
      %46 = dma.done [#allocation4], 128
    $region21: #{mixmatch_loss_pallas.1} parent=1 // pred_fallthru
      _
    // Predicated region
    $region22: #{mixmatch_loss_pallas.1} parent=1 // pred_check
      _
    $region23: #{mixmatch_loss_pallas.1} parent=1 // pred_check_branch
      %48 = sbr.rel (0) target = $region25
    $region24: #{mixmatch_loss_pallas.1} parent=1 // pred_region
      %49 = dma.done [#allocation7], 128
    $region25: #{mixmatch_loss_pallas.1} parent=1 // pred_fallthru
      _
    // Predicated region
    $region26: #{mixmatch_loss_pallas.1} parent=1 // pred_check
      _
    $region27: #{mixmatch_loss_pallas.1} parent=1 // pred_check_branch
      %51 = sbr.rel (0) target = $region29
    $region28: #{mixmatch_loss_pallas.1} parent=1 // pred_region
      %52 = dma.done [#allocation7], 128
    $region29: #{mixmatch_loss_pallas.1} parent=1 // pred_fallthru
      _
    %p53 = scmp.eq.s32.totalorder 0, 0
    // Predicated region
    $region30: #{mixmatch_loss_pallas.1} parent=1 // pred_check
      %p54 = pneg %p53
    $region31: #{mixmatch_loss_pallas.1} parent=1 // pred_check_branch
      %56 = sbr.rel (%p54) target = $region33
    $region32: #{mixmatch_loss_pallas.1} parent=1 // pred_region
      %s57 = scalar_lea.smem [#allocation2], 0
      %58 = sst [smem:[%s57]] 0.0
      %s59 = scalar_lea.smem [#allocation2], 1
      %60 = sst [smem:[%s59]] 0.0
    $region33: #{mixmatch_loss_pallas.1} parent=1 // pred_fallthru
      _
    %s61 = smul.u32 0, 8
    %v62 = vlaneseq
    %v63 = vshrl.u32 %v62, 7
    %v64 = vstv %s61
    %v65 = vadd.s32 %v64, %v63
    %v66 = vld [vmem:[#allocation3] sm:$0xff]
    %v67 = vld [vmem:[#allocation6] sm:$0xff]
    %vm68 = vcmask 261120
    %v69 = vsel %vm68, %v66, -inf
    %70 = vmax.xlane.f32.xlu0 %v69
    %v71 = vpop.xlane.xlu0 %70
    %v72 = vsub.f32 %v66, %v71
    %v73 = vmul.f32 %v72, 1.442695
    %v74 = vpow.pop %v73
    %v75 = vsel %vm68, %v74, 0.0
    %76 = vadd.xlane.f32.xlu0 %v75
    %v77 = vpop.xlane.xlu0 %76
    %v78 = vlog2.pop %v77
    %v79 = vmul.f32 %v78, 0.6931472
    %v80 = vsub.f32 %v72, %v79
    %v81 = vmul.f32 %v80, %v67
    %v82 = vsel %vm68, %v81, 0.0
    %83 = vadd.xlane.f32.xlu0 %v82
    %v84 = vpop.xlane.xlu0 %83
    %vm85 = vcmp.lt.s32.totalorder %v65, 8
    %v86 = vsel %vm85, 1, 0
    %v87 = vcvt.s32.f32 %v86
    %s88 = sld [smem:[#allocation2]]
    %v89 = vmul.f32 %v84, %v87
    %vm90 = vcmask 7168
    %v91 = vsel %vm90, %v89, 0.0
    %92 = vadd.xlane.f32.xlu0 %v91
    %v93 = vpop.xlane.xlu0 %92
    %v94 = vrot.slane %v93, 4
    %v95 = vadd.f32 %v93, %v94
    %v96 = vrot.slane %v95, 2
    %v97 = vadd.f32 %v95, %v96
    %v98 = vrot.slane %v97, 1
    %v99 = vadd.f32 %v97, %v98
    %s100 = vtos %v99
    %s101 = sadd.f32 %s88, %s100
    %s102 = scalar_lea.smem [#allocation2], 0
    %103 = sst [smem:[%s102]] %s101
    %v104 = vld [vmem:[#allocation8] sm:$0xff]
    %v105 = vld [vmem:[%s3] sm:$0xff]
    %v106 = vsel %vm68, %v104, -inf
    %107 = vmax.xlane.f32.xlu0 %v106
    %v108 = vpop.xlane.xlu0 %107
    %v109 = vsub.f32 %v104, %v108
    %v110 = vmul.f32 %v109, 1.442695
    %v111 = vpow.pop %v110
    %v112 = vsel %vm68, %v111, 0.0
    %113 = vadd.xlane.f32.xlu0 %v112
    %v114 = vpop.xlane.xlu0 %113
    %v115 = vrcp.pop %v114
    %v116 = vmul.f32 %v111, %v115
    %v117 = vsub.f32 %v116, %v105
    %v118 = vmul.f32 %v117, %v117
    %v119 = vsel %vm68, %v118, 0.0
    %120 = vadd.xlane.f32.xlu0 %v119
    %v121 = vpop.xlane.xlu0 %120
    %s122 = sld [smem:[#allocation2 + $0x1]]
    %v123 = vmul.f32 %v121, %v87
    %v124 = vsel %vm90, %v123, 0.0
    %125 = vadd.xlane.f32.xlu0 %v124
    %v126 = vpop.xlane.xlu0 %125
    %v127 = vrot.slane %v126, 4
    %v128 = vadd.f32 %v126, %v127
    %v129 = vrot.slane %v128, 2
    %v130 = vadd.f32 %v128, %v129
    %v131 = vrot.slane %v130, 1
    %v132 = vadd.f32 %v130, %v131
    %s133 = vtos %v132
    %s134 = sadd.f32 %s122, %s133
    %s135 = scalar_lea.smem [#allocation2], 1
    %136 = sst [smem:[%s135]] %s134
    // Predicated region
    $region34: #{mixmatch_loss_pallas.1} parent=1 // pred_check
      %p137 = pneg %p53
    $region35: #{mixmatch_loss_pallas.1} parent=1 // pred_check_branch
      %139 = sbr.rel (%p137) target = $region37
    $region36: #{mixmatch_loss_pallas.1} parent=1 // pred_region
      %s140 = sld [smem:[#allocation2]]
      %s141 = ssub.f32 0.0, %s140
      %s142 = smul.f32 %s141, 0.125
      %s143 = scalar_lea.smem [#allocation9], 0
      %144 = sst [smem:[%s143]] %s142
      %s145 = sld [smem:[#allocation2 + $0x1]]
      %s146 = smul.f32 %s145, 0.00390625
      %s147 = scalar_lea.smem [#allocation9], 1
      %148 = sst [smem:[%s147]] %s146
    $region37: #{mixmatch_loss_pallas.1} parent=1 // pred_fallthru
      _
    // Predicated region
    $region38: #{mixmatch_loss_pallas.1} parent=1 // pred_check
      _
    $region39: #{mixmatch_loss_pallas.1} parent=1 // pred_check_branch
      %150 = sbr.rel (0) target = $region41
    $region40: #{mixmatch_loss_pallas.1} parent=1 // pred_region
      %s152 = ssub.s32 16, 16
      %153 = vsyncadd [#allocation5], %s152
      %s155 = sshll.u32 %s4, 4
      %s156 = int_to_ptr.vmem [resolvable:$true] %s155
      %158 = dma.smem_to_vmem [#allocation9], 16, %s156, [#allocation5]
    $region41: #{mixmatch_loss_pallas.1} parent=1 // pred_fallthru
      _
    // Predicated region
    $region42: #{mixmatch_loss_pallas.1} parent=1 // pred_check
      _
    $region43: #{mixmatch_loss_pallas.1} parent=1 // pred_check_branch
      %160 = sbr.rel (0) target = $region45
    $region44: #{mixmatch_loss_pallas.1} parent=1 // pred_region
      %161 = dma.done [#allocation5], 16
    $region45: #{mixmatch_loss_pallas.1} parent=1 // pred_fallthru
      _
    %162 = sfence
    %163 = vsyncpa [#allocation4], 1
    %164 = vsyncpa [#allocation7], 1
    %165 = vsyncpa [#allocation5], 1

</llo_original>
